<compile_context>
chip_gen: v7x
topology: tpu7x:2x2x1
jax: 0.10.0
libtpu: 0.0.40
codegen_flags: <defaults>
</compile_context>

<pallas_src>
import math

import jax
import jax.numpy as jnp
from jax.experimental import pallas as pl
from jax.experimental.pallas import tpu as pltpu

# ----- small shapes consistent with the module (Config.D_RNN, batch, seq) ----
B = 2          # batch
L = 8          # sequence length
D_RNN = 128    # hidden dim (lane-dense; module default is 1024)
C_RGLRU = 8.0  # RGLRU self.c


# ---------------------------------------------------------------------------
# Kernel: one batch tile per grid step.
#   x_ref:     [BT, L, D]
#   w_ref:     [D, 2D]       fused [Wa^T | Wx^T]
#   b_ref:     [1, 2D]       fused [ba | bx]
#   cloga_ref: [1, D]        c * log(sigmoid(lmbd))
#   o_ref:     [BT, L, D]
# ---------------------------------------------------------------------------
def rglru_kernel(x_ref, w_ref, b_ref, cloga_ref, o_ref):
    Bt, Ls, Dr = x_ref.shape
    x = x_ref[...]                                            # [BT, L, D]

    # --- one fused MXU op for every (batch, time) gate projection ---
    # [BT, L, D] -> [BT*L, D] is a tile-aligned collapse (L == 8 sublanes).
    x_flat = x.reshape(Bt * Ls, Dr)
    gates = jax.nn.sigmoid(
        jnp.dot(x_flat, w_ref[...], preferred_element_type=jnp.float32)
        + b_ref[...]
    )                                                         # [BT*L, 2D]
    gates = gates.reshape(Bt, Ls, 2 * Dr)
    rt = gates[:, :, :Dr]                                     # r_t = sigmoid(x Wa^T + ba)
    it = gates[:, :, Dr:]                                     # i_t = sigmoid(x Wx^T + bx)

    # a_t = a ** (c * r_t) = exp(c * r_t * log a), precomputed for all t.
    at = jnp.exp(rt * cloga_ref[...])                         # [BT, L, D]
    # Guard against 1 - a_t^2 dipping slightly negative when a_t -> 1.
    gx = jnp.sqrt(jnp.maximum(1.0 - at * at, 0.0)) * (it * x)  # [BT, L, D]

    # --- pure-VPU elementwise recurrence over time, vectorized over batch ---
    h = jnp.zeros((Bt, 1, Dr), jnp.float32)
    ys = []
    for t in range(Ls):                                       # L = 8: fully unrolled
        h = at[:, t : t + 1, :] * h + gx[:, t : t + 1, :]
        ys.append(h)

    # Single lane-dense [BT, L, 128] writeback.
    o_ref[...] = jnp.concatenate(ys, axis=1)


def rglru(x, w_fused, b_fused, c_log_a, *, block_b=None):
    Bb, Ls, Dr = x.shape
    if block_b is None:
        block_b = min(Bb, 8)                                   # whole toy batch per step
    assert Bb % block_b == 0
    grid = (Bb // block_b,)
    return pl.pallas_call(
        rglru_kernel,
        out_shape=jax.ShapeDtypeStruct((Bb, Ls, Dr), jnp.float32),
        grid=grid,
        in_specs=[
            pl.BlockSpec((block_b, Ls, Dr), lambda i: (i, 0, 0)),  # x (batch tile)
            pl.BlockSpec((Dr, 2 * Dr), lambda i: (0, 0)),          # fused weights
            pl.BlockSpec((1, 2 * Dr), lambda i: (0, 0)),           # fused biases
            pl.BlockSpec((1, Dr), lambda i: (0, 0)),               # c * log(a)
        ],
        out_specs=pl.BlockSpec((block_b, Ls, Dr), lambda i: (i, 0, 0)),
        compiler_params=pltpu.CompilerParams(
            dimension_semantics=("parallel",)),                    # shards batch tiles on v7x
    )(x, w_fused, b_fused, c_log_a)


# ---------------------------------------------------------------------------
# Pure-JAX reference (mirrors the PyTorch forward exactly) for validation.
# ---------------------------------------------------------------------------
def rglru_reference(x, Wa, Wx, ba, bx, a, c):
    Bb, Ls, Dr = x.shape
    h = jnp.zeros((Bb, Dr), jnp.float32)
    ys = []
    for t in range(Ls):
        xt = x[:, t, :]
        rt = jax.nn.sigmoid(xt @ Wa.T + ba)
        it = jax.nn.sigmoid(xt @ Wx.T + bx)
        at = a ** (c * rt)
        h = at * h + jnp.sqrt(1.0 - at * at) * (it * xt)
        ys.append(h)
    return jnp.stack(ys, axis=1)


if __name__ == "__main__":
    key = jax.random.PRNGKey(0)
    kx, ka, kw, kl = jax.random.split(key, 4)

    # --- parameter init per RGLRU.reset_parameters ---
    std = 1.0 / math.sqrt(D_RNN)                       # kaiming_normal, fan_in, linear
    Wa = jax.random.normal(ka, (D_RNN, D_RNN), jnp.float32) * std   # [out, in]
    Wx = jax.random.normal(kw, (D_RNN, D_RNN), jnp.float32) * std
    ba = jnp.zeros((D_RNN,), jnp.float32)
    bx = jnp.zeros((D_RNN,), jnp.float32)
    lmbd = jax.random.uniform(kl, (D_RNN,), jnp.float32, 0.9, 0.999)
    a = jax.nn.sigmoid(lmbd)                           # computed once (as in __init__)

    # --- host-side fused / pre-transposed kernel parameters ---
    w_fused = jnp.concatenate([Wa.T, Wx.T], axis=1)    # [D, 2D]
    b_fused = jnp.concatenate([ba, bx])[None, :]       # [1, 2D]
    c_log_a = (C_RGLRU * jnp.log(a))[None, :]          # [1, D]

    x = jax.random.normal(kx, (B, L, D_RNN), jnp.float32)

    y = rglru(x, w_fused, b_fused, c_log_a)
    jax.block_until_ready(y)
    assert y.shape == (B, L, D_RNN)

    y_ref = rglru_reference(x, Wa, Wx, ba, bx, a, C_RGLRU)
    assert jnp.allclose(y, y_ref, rtol=1e-5, atol=1e-5), float(
        jnp.max(jnp.abs(y - y_ref)))

    print("KERNEL_OK")
</pallas_src>

<mosaic_0001>
module attributes {stable_mosaic.version = 11 : i64} {
  func.func @rglru_kernel(%arg0: i32, %arg1: memref<2x8x128xf32, #tpu.memory_space<vmem>>, %arg2: memref<128x256xf32, #tpu.memory_space<vmem>>, %arg3: memref<1x256xf32, #tpu.memory_space<vmem>>, %arg4: memref<1x128xf32, #tpu.memory_space<vmem>>, %arg5: memref<2x8x128xf32, #tpu.memory_space<vmem>>) attributes {dimension_semantics = [#tpu.dimension_semantics<parallel>], iteration_bounds = array<i64: 1>, scalar_prefetch = 0 : i64, scratch_operands = 0 : i64, tpu.core_type = #tpu.core_type<tc>, window_params = [{transform_indices = @transform_0, window_bounds = array<i64: 2, 8, 128>}, {pipeline_mode = #tpu.pipeline_mode<synchronous>, transform_indices = @transform_1, window_bounds = array<i64: 128, 256>}, {pipeline_mode = #tpu.pipeline_mode<synchronous>, transform_indices = @transform_2, window_bounds = array<i64: 1, 256>}, {pipeline_mode = #tpu.pipeline_mode<synchronous>, transform_indices = @transform_3, window_bounds = array<i64: 1, 128>}, {transform_indices = @transform_4, window_bounds = array<i64: 2, 8, 128>}]} {
    %c0 = arith.constant 0 : index
    %c0_0 = arith.constant 0 : index
    %c0_1 = arith.constant 0 : index
    %0 = vector.load %arg1[%c0, %c0_0, %c0_1] : memref<2x8x128xf32, #tpu.memory_space<vmem>>, vector<2x8x128xf32>
    %1 = vector.shape_cast %0 : vector<2x8x128xf32> to vector<16x128xf32>
    %c0_2 = arith.constant 0 : index
    %c0_3 = arith.constant 0 : index
    %2 = vector.load %arg2[%c0_2, %c0_3] : memref<128x256xf32, #tpu.memory_space<vmem>>, vector<128x256xf32>
    %cst = arith.constant dense<0.000000e+00> : vector<16x256xf32>
    %3 = tpu.matmul %1, %2, %cst {dimension_numbers = #tpu.dot_dimension_numbers<[1], [0], [0], [1], [0, 0, 1, 1], [], []>} : vector<16x128xf32>, vector<128x256xf32>, vector<16x256xf32> -> vector<16x256xf32>
    %c0_4 = arith.constant 0 : index
    %c0_5 = arith.constant 0 : index
    %4 = vector.load %arg3[%c0_4, %c0_5] : memref<1x256xf32, #tpu.memory_space<vmem>>, vector<1x256xf32>
    %5 = vector.broadcast %4 : vector<1x256xf32> to vector<16x256xf32>
    %6 = arith.addf %3, %5 : vector<16x256xf32>
    %7 = arith.negf %6 : vector<16x256xf32>
    %8 = math.exp %7 : vector<16x256xf32>
    %cst_6 = arith.constant 1.000000e+00 : f32
    %9 = vector.broadcast %cst_6 : f32 to vector<16x256xf32>
    %10 = arith.addf %9, %8 : vector<16x256xf32>
    %11 = arith.divf %9, %10 : vector<16x256xf32>
    %12 = vector.shape_cast %11 : vector<16x256xf32> to vector<2x8x256xf32>
    %13 = vector.extract_strided_slice %12 {offsets = [0, 0, 0], sizes = [2, 8, 128], strides = [1, 1, 1]} : vector<2x8x256xf32> to vector<2x8x128xf32>
    %14 = vector.extract_strided_slice %12 {offsets = [0, 0, 128], sizes = [2, 8, 128], strides = [1, 1, 1]} : vector<2x8x256xf32> to vector<2x8x128xf32>
    %c0_7 = arith.constant 0 : index
    %c0_8 = arith.constant 0 : index
    %15 = vector.load %arg4[%c0_7, %c0_8] : memref<1x128xf32, #tpu.memory_space<vmem>>, vector<1x128xf32>
    %16 = vector.shape_cast %15 : vector<1x128xf32> to vector<1x1x128xf32>
    %17 = vector.broadcast %16 : vector<1x1x128xf32> to vector<2x8x128xf32>
    %18 = arith.mulf %13, %17 : vector<2x8x128xf32>
    %19 = math.exp %18 : vector<2x8x128xf32>
    %20 = arith.mulf %19, %19 : vector<2x8x128xf32>
    %cst_9 = arith.constant 1.000000e+00 : f32
    %21 = vector.broadcast %cst_9 : f32 to vector<2x8x128xf32>
    %22 = arith.subf %21, %20 : vector<2x8x128xf32>
    %cst_10 = arith.constant 0.000000e+00 : f32
    %23 = vector.broadcast %cst_10 : f32 to vector<2x8x128xf32>
    %24 = arith.maximumf %22, %23 : vector<2x8x128xf32>
    %25 = math.sqrt %24 : vector<2x8x128xf32>
    %26 = arith.mulf %14, %0 : vector<2x8x128xf32>
    %27 = arith.mulf %25, %26 : vector<2x8x128xf32>
    %cst_11 = arith.constant 0.000000e+00 : f32
    %28 = vector.broadcast %cst_11 : f32 to vector<2x1x128xf32>
    %29 = vector.extract_strided_slice %19 {offsets = [0, 0, 0], sizes = [2, 1, 128], strides = [1, 1, 1]} : vector<2x8x128xf32> to vector<2x1x128xf32>
    %30 = arith.mulf %29, %28 : vector<2x1x128xf32>
    %31 = vector.extract_strided_slice %27 {offsets = [0, 0, 0], sizes = [2, 1, 128], strides = [1, 1, 1]} : vector<2x8x128xf32> to vector<2x1x128xf32>
    %32 = arith.addf %30, %31 : vector<2x1x128xf32>
    %33 = vector.extract_strided_slice %19 {offsets = [0, 1, 0], sizes = [2, 1, 128], strides = [1, 1, 1]} : vector<2x8x128xf32> to vector<2x1x128xf32>
    %34 = arith.mulf %33, %32 : vector<2x1x128xf32>
    %35 = vector.extract_strided_slice %27 {offsets = [0, 1, 0], sizes = [2, 1, 128], strides = [1, 1, 1]} : vector<2x8x128xf32> to vector<2x1x128xf32>
    %36 = arith.addf %34, %35 : vector<2x1x128xf32>
    %37 = vector.extract_strided_slice %19 {offsets = [0, 2, 0], sizes = [2, 1, 128], strides = [1, 1, 1]} : vector<2x8x128xf32> to vector<2x1x128xf32>
    %38 = arith.mulf %37, %36 : vector<2x1x128xf32>
    %39 = vector.extract_strided_slice %27 {offsets = [0, 2, 0], sizes = [2, 1, 128], strides = [1, 1, 1]} : vector<2x8x128xf32> to vector<2x1x128xf32>
    %40 = arith.addf %38, %39 : vector<2x1x128xf32>
    %41 = vector.extract_strided_slice %19 {offsets = [0, 3, 0], sizes = [2, 1, 128], strides = [1, 1, 1]} : vector<2x8x128xf32> to vector<2x1x128xf32>
    %42 = arith.mulf %41, %40 : vector<2x1x128xf32>
    %43 = vector.extract_strided_slice %27 {offsets = [0, 3, 0], sizes = [2, 1, 128], strides = [1, 1, 1]} : vector<2x8x128xf32> to vector<2x1x128xf32>
    %44 = arith.addf %42, %43 : vector<2x1x128xf32>
    %45 = vector.extract_strided_slice %19 {offsets = [0, 4, 0], sizes = [2, 1, 128], strides = [1, 1, 1]} : vector<2x8x128xf32> to vector<2x1x128xf32>
    %46 = arith.mulf %45, %44 : vector<2x1x128xf32>
    %47 = vector.extract_strided_slice %27 {offsets = [0, 4, 0], sizes = [2, 1, 128], strides = [1, 1, 1]} : vector<2x8x128xf32> to vector<2x1x128xf32>
    %48 = arith.addf %46, %47 : vector<2x1x128xf32>
    %49 = vector.extract_strided_slice %19 {offsets = [0, 5, 0], sizes = [2, 1, 128], strides = [1, 1, 1]} : vector<2x8x128xf32> to vector<2x1x128xf32>
    %50 = arith.mulf %49, %48 : vector<2x1x128xf32>
    %51 = vector.extract_strided_slice %27 {offsets = [0, 5, 0], sizes = [2, 1, 128], strides = [1, 1, 1]} : vector<2x8x128xf32> to vector<2x1x128xf32>
    %52 = arith.addf %50, %51 : vector<2x1x128xf32>
    %53 = vector.extract_strided_slice %19 {offsets = [0, 6, 0], sizes = [2, 1, 128], strides = [1, 1, 1]} : vector<2x8x128xf32> to vector<2x1x128xf32>
    %54 = arith.mulf %53, %52 : vector<2x1x128xf32>
    %55 = vector.extract_strided_slice %27 {offsets = [0, 6, 0], sizes = [2, 1, 128], strides = [1, 1, 1]} : vector<2x8x128xf32> to vector<2x1x128xf32>
    %56 = arith.addf %54, %55 : vector<2x1x128xf32>
    %57 = vector.extract_strided_slice %19 {offsets = [0, 7, 0], sizes = [2, 1, 128], strides = [1, 1, 1]} : vector<2x8x128xf32> to vector<2x1x128xf32>
    %58 = arith.mulf %57, %56 : vector<2x1x128xf32>
    %59 = vector.extract_strided_slice %27 {offsets = [0, 7, 0], sizes = [2, 1, 128], strides = [1, 1, 1]} : vector<2x8x128xf32> to vector<2x1x128xf32>
    %60 = arith.addf %58, %59 : vector<2x1x128xf32>
    %61 = tpu.concatenate %32, %36, %40, %44, %48, %52, %56, %60 in 1 : vector<2x1x128xf32>, vector<2x1x128xf32>, vector<2x1x128xf32>, vector<2x1x128xf32>, vector<2x1x128xf32>, vector<2x1x128xf32>, vector<2x1x128xf32>, vector<2x1x128xf32> -> vector<2x8x128xf32>
    %c0_12 = arith.constant 0 : index
    %c0_13 = arith.constant 0 : index
    %c0_14 = arith.constant 0 : index
    %62 = vector.load %arg5[%c0_12, %c0_13, %c0_14] : memref<2x8x128xf32, #tpu.memory_space<vmem>>, vector<2x8x128xf32>
    tpu.vector_store %arg5[%c0_12, %c0_13, %c0_14], %61 {strides = array<i32>} : memref<2x8x128xf32, #tpu.memory_space<vmem>>, vector<2x8x128xf32>,
    return
  }
  func.func @transform_0(%arg0: i32) -> (i32, i32, i32) {
    %c0_i32 = arith.constant 0 : i32
    %c0_i32_0 = arith.constant 0 : i32
    %c0_i32_1 = arith.constant 0 : i32
    return %arg0, %c0_i32, %c0_i32_0 : i32, i32, i32
  }
  func.func @transform_1(%arg0: i32) -> (i32, i32) {
    %c0_i32 = arith.constant 0 : i32
    %c0_i32_0 = arith.constant 0 : i32
    %c0_i32_1 = arith.constant 0 : i32
    return %c0_i32, %c0_i32_0 : i32, i32
  }
  func.func @transform_2(%arg0: i32) -> (i32, i32) {
    %c0_i32 = arith.constant 0 : i32
    %c0_i32_0 = arith.constant 0 : i32
    %c0_i32_1 = arith.constant 0 : i32
    return %c0_i32, %c0_i32_0 : i32, i32
  }
  func.func @transform_3(%arg0: i32) -> (i32, i32) {
    %c0_i32 = arith.constant 0 : i32
    %c0_i32_0 = arith.constant 0 : i32
    %c0_i32_1 = arith.constant 0 : i32
    return %c0_i32, %c0_i32_0 : i32, i32
  }
  func.func @transform_4(%arg0: i32) -> (i32, i32, i32) {
    %c0_i32 = arith.constant 0 : i32
    %c0_i32_0 = arith.constant 0 : i32
    %c0_i32_1 = arith.constant 0 : i32
    return %arg0, %c0_i32, %c0_i32_0 : i32, i32, i32
  }
}

</mosaic_0001>

<llo_original>
// kernel: tpu_custom_call.1
$region0: #{tpu_custom_call.1}
  #allocation0 [shape = 'u32[]', space=smem, size = 0x4, offset = 0x4, fixed_abs, tag = 'smem constant byte address 0x4 - core index']
  #allocation1 [shape = 'u32[144,128]{1,0:T(1,128)}', space=vmem, size = 0x12000, scoped, tag = 'internal scratch']
  %s0 = inlined_call_operand.hbm [shape: f32[2,8,128], index: 0, kind: input, shape index: {}]
  %s1 = inlined_call_operand.hbm [shape: f32[128,256], index: 1, kind: input, shape index: {}]
  %s2 = inlined_call_operand.vmem [shape: f32[1,256], index: 2, kind: input, shape index: {}]
  %s3 = inlined_call_operand.vmem [shape: f32[1,128], index: 3, kind: input, shape index: {}]
  %s4 = inlined_call_operand.hbm [shape: f32[2,8,128], index: 4, kind: output, shape index: {}]
  %s5 = sld [smem:[#allocation0]]
  $region34: #{tpu_custom_call.1} parent=0
    _
  %s7 = ssub.s32 1, %s5
  %s8 = scalar_select 0, %s7, %s5
  $region1: #{tpu_custom_call.1} parent=0
    #allocation2 [shape = 'u8[8192]{0}', space=vmem, size = 0x2000, scoped, tag = 'input window, operand 0, single buffered']
    #allocation3 [shape = 's32[1]{0}', space=sflag, size = 0x4, scoped, tag = 'scoped memory for tpu_custom_call.1']
    #allocation4 [shape = 's32[1]{0}', space=sflag, size = 0x4, scoped, tag = 'scoped memory for tpu_custom_call.1']
    #allocation5 [shape = 'u8[131072]{0}', space=vmem, size = 0x20000, scoped, tag = 'input window, operand 1, single buffered']
    #allocation6 [shape = 's32[1]{0}', space=sflag, size = 0x4, scoped, tag = 'scoped memory for tpu_custom_call.1']
    #allocation7 [shape = 'u8[8192]{0}', space=vmem, size = 0x2000, scoped, tag = 'output window, operand 0, single buffered']
    %9 = vsyncpa [#allocation3], 0
    %10 = vsyncpa [#allocation6], 0
    %11 = vsyncpa [#allocation4], 0
    // Predicated region
    $region2: #{tpu_custom_call.1} parent=1 // pred_check
      _
    $region3: #{tpu_custom_call.1} parent=1 // pred_check_branch
      %13 = sbr.rel (0) target = $region5
    $region4: #{tpu_custom_call.1} parent=1 // pred_region
      %s15 = ssub.s32 256, 256
      %16 = vsyncadd [#allocation3], %s15
      %s17 = sshll.u32 [#allocation2], 4
      %s18 = int_to_ptr.vmem [resolvable:$true] %s17
      %23 = dma.hbm_to_vmem [thread:$0]  %s0, 256, %s18, [#allocation3], 128, 128, 8
    $region5: #{tpu_custom_call.1} parent=1 // pred_fallthru
      _
    // Predicated region
    $region6: #{tpu_custom_call.1} parent=1 // pred_check
      _
    $region7: #{tpu_custom_call.1} parent=1 // pred_check_branch
      %25 = sbr.rel (0) target = $region9
    $region8: #{tpu_custom_call.1} parent=1 // pred_region
      %s27 = ssub.s32 4096, 4096
      %28 = vsyncadd [#allocation6], %s27
      %s29 = sshll.u32 [#allocation5], 4
      %s30 = int_to_ptr.vmem [resolvable:$true] %s29
      %35 = dma.hbm_to_vmem [thread:$0]  %s1, 4096, %s30, [#allocation6], 256, 256, 16
    $region9: #{tpu_custom_call.1} parent=1 // pred_fallthru
      _
    // Predicated region
    $region10: #{tpu_custom_call.1} parent=1 // pred_check
      _
    $region11: #{tpu_custom_call.1} parent=1 // pred_check_branch
      %37 = sbr.rel (0) target = $region13
    $region12: #{tpu_custom_call.1} parent=1 // pred_region
      _
    $region13: #{tpu_custom_call.1} parent=1 // pred_fallthru
      _
    // Predicated region
    $region14: #{tpu_custom_call.1} parent=1 // pred_check
      _
    $region15: #{tpu_custom_call.1} parent=1 // pred_check_branch
      %39 = sbr.rel (0) target = $region17
    $region16: #{tpu_custom_call.1} parent=1 // pred_region
      _
    $region17: #{tpu_custom_call.1} parent=1 // pred_fallthru
      _
    // Predicated region
    $region18: #{tpu_custom_call.1} parent=1 // pred_check
      _
    $region19: #{tpu_custom_call.1} parent=1 // pred_check_branch
      %41 = sbr.rel (0) target = $region21
    $region20: #{tpu_custom_call.1} parent=1 // pred_region
      %42 = dma.done [#allocation3], 256
    $region21: #{tpu_custom_call.1} parent=1 // pred_fallthru
      _
    // Predicated region
    $region22: #{tpu_custom_call.1} parent=1 // pred_check
      _
    $region23: #{tpu_custom_call.1} parent=1 // pred_check_branch
      %44 = sbr.rel (0) target = $region25
    $region24: #{tpu_custom_call.1} parent=1 // pred_region
      %45 = dma.done [#allocation6], 4096
    $region25: #{tpu_custom_call.1} parent=1 // pred_fallthru
      _
    %v46 = vld [vmem:[#allocation2] sm:$0xff]
    %v47 = vld [vmem:[#allocation2 + $0x8] sm:$0xff]
    %v48 = vld [vmem:[#allocation5] sm:$0xff]
    %v49 = vld [vmem:[#allocation5 + $0x8] sm:$0xff]
    %v50 = vld [vmem:[#allocation5 + $0x10] sm:$0xff]
    %v51 = vld [vmem:[#allocation5 + $0x18] sm:$0xff]
    %v52 = vld [vmem:[#allocation5 + $0x20] sm:$0xff]
    %v53 = vld [vmem:[#allocation5 + $0x28] sm:$0xff]
    %v54 = vld [vmem:[#allocation5 + $0x30] sm:$0xff]
    %v55 = vld [vmem:[#allocation5 + $0x38] sm:$0xff]
    %v56 = vld [vmem:[#allocation5 + $0x40] sm:$0xff]
    %v57 = vld [vmem:[#allocation5 + $0x48] sm:$0xff]
    %v58 = vld [vmem:[#allocation5 + $0x50] sm:$0xff]
    %v59 = vld [vmem:[#allocation5 + $0x58] sm:$0xff]
    %v60 = vld [vmem:[#allocation5 + $0x60] sm:$0xff]
    %v61 = vld [vmem:[#allocation5 + $0x68] sm:$0xff]
    %v62 = vld [vmem:[#allocation5 + $0x70] sm:$0xff]
    %v63 = vld [vmem:[#allocation5 + $0x78] sm:$0xff]
    %v64 = vld [vmem:[#allocation5 + $0x80] sm:$0xff]
    %v65 = vld [vmem:[#allocation5 + $0x88] sm:$0xff]
    %v66 = vld [vmem:[#allocation5 + $0x90] sm:$0xff]
    %v67 = vld [vmem:[#allocation5 + $0x98] sm:$0xff]
    %v68 = vld [vmem:[#allocation5 + $0xa0] sm:$0xff]
    %v69 = vld [vmem:[#allocation5 + $0xa8] sm:$0xff]
    %v70 = vld [vmem:[#allocation5 + $0xb0] sm:$0xff]
    %v71 = vld [vmem:[#allocation5 + $0xb8] sm:$0xff]
    %v72 = vld [vmem:[#allocation5 + $0xc0] sm:$0xff]
    %v73 = vld [vmem:[#allocation5 + $0xc8] sm:$0xff]
    %v74 = vld [vmem:[#allocation5 + $0xd0] sm:$0xff]
    %v75 = vld [vmem:[#allocation5 + $0xd8] sm:$0xff]
    %v76 = vld [vmem:[#allocation5 + $0xe0] sm:$0xff]
    %v77 = vld [vmem:[#allocation5 + $0xe8] sm:$0xff]
    %v78 = vld [vmem:[#allocation5 + $0xf0] sm:$0xff]
    %v79 = vld [vmem:[#allocation5 + $0xf8] sm:$0xff]
    %v80 = vld [vmem:[%s2] sm:$0x3]
    %v82 = vlaneseq
    %v83 = vshrl.u32 %v82, 7
    %v84 = vsub.s32 0, %v83
    %v85 = vrot.slane %v80, %v84
    %v86 = vlaneseq
    %v87 = vshrl.u32 %v86, 7
    %v88 = vsub.s32 1, %v87
    %v89 = vrot.slane %v80, %v88
    %92 = vmatprep.subr.mxu0 %v49
    %93 = vmatpush1.msra.mxu0 %v48
    %94 = vmatprep.subr.mxu0 %v51
    %95 = vmatpush1.msra.mxu0 %v50
    %96 = vmatprep.subr.mxu0 %v53
    %97 = vmatpush1.msra.mxu0 %v52
    %98 = vmatprep.subr.mxu0 %v55
    %99 = vmatpush1.msra.mxu0 %v54
    %100 = vmatprep.subr.mxu0 %v57
    %101 = vmatpush1.msra.mxu0 %v56
    %102 = vmatprep.subr.mxu0 %v59
    %103 = vmatpush1.msra.mxu0 %v58
    %104 = vmatprep.subr.mxu0 %v61
    %105 = vmatpush1.msra.mxu0 %v60
    %106 = vmatprep.subr.mxu0 %v63
    %107 = vmatpush1.msra.mxu0 %v62
    %108 = vmatprep.subr.mxu0 %v65
    %109 = vmatpush1.msra.mxu0 %v64
    %110 = vmatprep.subr.mxu0 %v67
    %111 = vmatpush1.msra.mxu0 %v66
    %112 = vmatprep.subr.mxu0 %v69
    %113 = vmatpush1.msra.mxu0 %v68
    %114 = vmatprep.subr.mxu0 %v71
    %115 = vmatpush1.msra.mxu0 %v70
    %116 = vmatprep.subr.mxu0 %v73
    %117 = vmatpush1.msra.mxu0 %v72
    %118 = vmatprep.subr.mxu0 %v75
    %119 = vmatpush1.msra.mxu0 %v74
    %120 = vmatprep.subr.mxu0 %v77
    %121 = vmatpush1.msra.mxu0 %v76
    %122 = vmatprep.subr.mxu0 %v79
    %123 = vmatpush1.msra.mxu0 %v78
    %124 = vmatprep.subr.mxu0 0.0
    %125 = vmatpush1.msra.mxu0 0.0
    %126 = vmatprep.subr.mxu0 0.0
    %127 = vmatpush1.msra.mxu0 0.0
    %128 = vmatprep.subr.mxu0 0.0
    %129 = vmatpush1.msra.mxu0 0.0
    %130 = vmatprep.subr.mxu0 0.0
    %131 = vmatpush1.msra.mxu0 0.0
    %132 = vmatprep.subr.mxu0 0.0
    %133 = vmatpush1.msra.mxu0 0.0
    %134 = vmatprep.subr.mxu0 0.0
    %135 = vmatpush1.msra.mxu0 0.0
    %136 = vmatprep.subr.mxu0 0.0
    %137 = vmatpush1.msra.mxu0 0.0
    %138 = vmatprep.subr.mxu0 0.0
    %139 = vmatpush1.msra.mxu0 0.0
    %140 = vmatprep.subr.mxu0 0.0
    %141 = vmatpush1.msra.mxu0 0.0
    %142 = vmatprep.subr.mxu0 0.0
    %143 = vmatpush1.msra.mxu0 0.0
    %144 = vmatprep.subr.mxu0 0.0
    %145 = vmatpush1.msra.mxu0 0.0
    %146 = vmatprep.subr.mxu0 0.0
    %147 = vmatpush1.msra.mxu0 0.0
    %148 = vmatprep.subr.mxu0 0.0
    %149 = vmatpush1.msra.mxu0 0.0
    %150 = vmatprep.subr.mxu0 0.0
    %151 = vmatpush1.msra.mxu0 0.0
    %152 = vmatprep.subr.mxu0 0.0
    %153 = vmatpush1.msra.mxu0 0.0
    %154 = vmatprep.subr.mxu0 0.0
    %155 = vmatpush1.msra.mxu0 0.0
    %156 = vmatprep.mubr.f32.mxu0 0.0
    %157 = vmatmul.mubr.f32.gmra.mrb[0].mxu0 %v46
    %v158 = vpop.f32.mrb[0].mxu0
    %v159 = vadd.f32 %v85, %v158
    %v160 = vpop.f32.mrb[0].mxu0
    %v161 = vadd.f32 %v89, %v160
    %162 = vmatprep.mubr.f32.mxu0 0.0
    %163 = vmatmul.mubr.f32.gmra.mrb[0].mxu0 %v47
    %v164 = vpop.f32.mrb[0].mxu0
    %v165 = vadd.f32 %v85, %v164
    %v166 = vpop.f32.mrb[0].mxu0
    %v167 = vadd.f32 %v89, %v166
    %168 = vdwg.mxu0
    %v169 = vxor.u32 %v159, 2147483648
    %v170 = vxor.u32 %v161, 2147483648
    %v171 = vxor.u32 %v165, 2147483648
    %v172 = vxor.u32 %v167, 2147483648
    %v173 = vmul.f32 %v169, 1.442695
    %v174 = vpow.pop %v173
    %v175 = vmul.f32 %v170, 1.442695
    %v176 = vpow.pop %v175
    %v177 = vmul.f32 %v171, 1.442695
    %v178 = vpow.pop %v177
    %v179 = vmul.f32 %v172, 1.442695
    %v180 = vpow.pop %v179
    %v181 = vadd.f32 %v174, 1.0
    %v182 = vadd.f32 %v176, 1.0
    %v183 = vadd.f32 %v178, 1.0
    %v184 = vadd.f32 %v180, 1.0
    %v185 = vrcp.pop %v181
    %v186 = vmul.f32 1.0, %v185
    %v187 = vrcp.pop %v182
    %v188 = vmul.f32 1.0, %v187
    %v189 = vrcp.pop %v183
    %v190 = vmul.f32 1.0, %v189
    %v191 = vrcp.pop %v184
    %v192 = vmul.f32 1.0, %v191
    %v193 = vld [vmem:[%s3] sm:$0x1]
    %v195 = vlaneseq
    %v196 = vshrl.u32 %v195, 7
    %v197 = vsub.s32 0, %v196
    %v198 = vrot.slane %v193, %v197
    %v200 = vmul.f32 %v186, %v198
    %v201 = vmul.f32 %v190, %v198
    %v202 = vmul.f32 %v200, 1.442695
    %v203 = vpow.pop %v202
    %v204 = vmul.f32 %v201, 1.442695
    %v205 = vpow.pop %v204
    %v206 = vmul.f32 %v203, %v203
    %v207 = vmul.f32 %v205, %v205
    %v208 = vsub.f32 1.0, %v206
    %v209 = vsub.f32 1.0, %v207
    %v210 = vmax.f32 %v208, 0.0
    %v211 = vmax.f32 %v209, 0.0
    %v212 = vrsqrt.pop %v210
    %v213 = vmul.f32 %v210, %v212
    %vm214 = vcmp.eq.f32.partialorder %v210, inf
    %v215 = vsel %vm214, %v210, %v213
    %vm216 = vcmp.eq.f32.partialorder %v210, 0.0
    %v217 = vand.u32 %v210, 2147483648
    %v218 = vsel %vm216, %v217, %v215
    %v219 = vrsqrt.pop %v211
    %v220 = vmul.f32 %v211, %v219
    %vm221 = vcmp.eq.f32.partialorder %v211, inf
    %v222 = vsel %vm221, %v211, %v220
    %vm223 = vcmp.eq.f32.partialorder %v211, 0.0
    %v224 = vand.u32 %v211, 2147483648
    %v225 = vsel %vm223, %v224, %v222
    %v226 = vmul.f32 %v188, %v46
    %v227 = vmul.f32 %v192, %v47
    %v228 = vmul.f32 %v218, %v226
    %v229 = vmul.f32 %v225, %v227
    %v230 = vmul.f32 %v203, 0.0
    %v231 = vmul.f32 %v205, 0.0
    %v232 = vadd.f32 %v230, %v228
    %v233 = vadd.f32 %v231, %v229
    %v236 = vrot.slane %v232, 7
    %v237 = vrot.slane %v233, 7
    %v240 = vmul.f32 %v203, %v236
    %v241 = vmul.f32 %v205, %v237
    %v242 = vadd.f32 %v240, %v228
    %v243 = vadd.f32 %v241, %v229
    %v246 = vrot.slane %v242, 7
    %v247 = vrot.slane %v243, 7
    %v250 = vmul.f32 %v203, %v246
    %v251 = vmul.f32 %v205, %v247
    %v252 = vadd.f32 %v250, %v228
    %v253 = vadd.f32 %v251, %v229
    %v256 = vrot.slane %v252, 7
    %v257 = vrot.slane %v253, 7
    %v260 = vmul.f32 %v203, %v256
    %v261 = vmul.f32 %v205, %v257
    %v262 = vadd.f32 %v260, %v228
    %v263 = vadd.f32 %v261, %v229
    %v266 = vrot.slane %v262, 7
    %v267 = vrot.slane %v263, 7
    %v270 = vmul.f32 %v203, %v266
    %v271 = vmul.f32 %v205, %v267
    %v272 = vadd.f32 %v270, %v228
    %v273 = vadd.f32 %v271, %v229
    %v276 = vrot.slane %v272, 7
    %v277 = vrot.slane %v273, 7
    %v280 = vmul.f32 %v203, %v276
    %v281 = vmul.f32 %v205, %v277
    %v282 = vadd.f32 %v280, %v228
    %v283 = vadd.f32 %v281, %v229
    %v286 = vrot.slane %v282, 7
    %v287 = vrot.slane %v283, 7
    %v290 = vmul.f32 %v203, %v286
    %v291 = vmul.f32 %v205, %v287
    %v292 = vadd.f32 %v290, %v228
    %v293 = vadd.f32 %v291, %v229
    %v296 = vrot.slane %v292, 7
    %v297 = vrot.slane %v293, 7
    %v300 = vmul.f32 %v203, %v296
    %v301 = vmul.f32 %v205, %v297
    %v302 = vadd.f32 %v300, %v228
    %v303 = vadd.f32 %v301, %v229
    %vm304 = vcmask 1040384
    %v305 = vsel %vm304, %v232, %v242
    %v306 = vsel %vm304, %v233, %v243
    %vm307 = vcmask 1041408
    %v308 = vsel %vm307, %v305, %v252
    %v309 = vsel %vm307, %v306, %v253
    %vm310 = vcmask 1042432
    %v311 = vsel %vm310, %v308, %v262
    %v312 = vsel %vm310, %v309, %v263
    %vm313 = vcmask 1043456
    %v314 = vsel %vm313, %v311, %v272
    %v315 = vsel %vm313, %v312, %v273
    %vm316 = vcmask 1044480
    %v317 = vsel %vm316, %v314, %v282
    %v318 = vsel %vm316, %v315, %v283
    %vm319 = vcmask 1045504
    %v320 = vsel %vm319, %v317, %v292
    %v321 = vsel %vm319, %v318, %v293
    %vm322 = vcmask 1046528
    %v323 = vsel %vm322, %v320, %v302
    %v324 = vsel %vm322, %v321, %v303
    %325 = vst [vmem:[#allocation7] sm:$0xff] %v323
    %326 = vst [vmem:[#allocation7 + $0x8] sm:$0xff] %v324
    // Predicated region
    $region26: #{tpu_custom_call.1} parent=1 // pred_check
      _
    $region27: #{tpu_custom_call.1} parent=1 // pred_check_branch
      %328 = sbr.rel (0) target = $region29
    $region28: #{tpu_custom_call.1} parent=1 // pred_region
      %s330 = ssub.s32 256, 256
      %331 = vsyncadd [#allocation4], %s330
      %s332 = sshll.u32 [#allocation7], 4
      %s333 = int_to_ptr.vmem [resolvable:$true] %s332
      %338 = dma.vmem_to_hbm [thread:$0]  %s333, 256, %s4, [#allocation4], 128, 128, 8
    $region29: #{tpu_custom_call.1} parent=1 // pred_fallthru
      _
    // Predicated region
    $region30: #{tpu_custom_call.1} parent=1 // pred_check
      _
    $region31: #{tpu_custom_call.1} parent=1 // pred_check_branch
      %340 = sbr.rel (0) target = $region33
    $region32: #{tpu_custom_call.1} parent=1 // pred_region
      %341 = dma.done [#allocation4], 256
    $region33: #{tpu_custom_call.1} parent=1 // pred_fallthru
      _
    %342 = vsyncpa [#allocation3], 1
    %343 = vsyncpa [#allocation6], 1
    %344 = vsyncpa [#allocation4], 1

</llo_original>
